<compile_context>
chip_gen: v5e
topology: v5e:2x2
jax: 0.10.0
libtpu: 0.0.40
codegen_flags: <defaults>
</compile_context>

<pallas_src>
import jax
import jax.numpy as jnp
from jax.experimental import pallas as pl
from jax.experimental.pallas import tpu as pltpu

_LANES = 1024     # lane width of the slab (multiple of 128)
_TM_MAX = 512     # max rows per tile -> (512, 1024) f32 = 2 MiB per operand tile


# ----------------------------- kernels --------------------------------------

def _div_div_kernel(a_ref, b_ref, o_ref):
    # c = a / b ; out = c / c  (elementwise, VPU/EUP; NaN-propagating like torch)
    c = a_ref[...] / b_ref[...]
    o_ref[...] = c / c


def _sq_div_scalar_kernel(b_ref, a_ref, o_ref):
    # out = (a * a) / b_scalar ; scalar reciprocal hoisted to one exact divide,
    # per-element work is a cheap VALU multiply.  (No approx reciprocal: test
    # tolerance is 1e-6.)
    a = a_ref[...]
    inv_b = 1.0 / b_ref[0]
    o_ref[...] = (a * a) * inv_b


# ----------------------------- layout helpers --------------------------------

def _slab_geometry(size):
    """Pick (lane_width, tile_rows, padded_rows) for a lane-dense [rows, L] slab."""
    L = _LANES
    rows = pl.cdiv(size, L)
    rows = ((rows + 7) // 8) * 8            # sublane multiple of 8
    tm = min(_TM_MAX, rows)
    rows_pad = pl.cdiv(rows, tm) * tm       # grid divides evenly
    return L, tm, rows_pad


def _pad_to_slab(flat, rows_pad, L):
    total = rows_pad * L
    pad = total - flat.shape[0]
    if pad:
        flat = jnp.pad(flat, (0, pad), constant_values=1.0)  # benign filler (1/1 = 1)
    return flat.reshape(rows_pad, L)


# ----------------------------- wrapper ---------------------------------------

def simple_div_module(a, b):
    """Pallas equivalent of SimpleDivModule.forward(a, b) (rounding_mode=None)."""
    a = jnp.asarray(a, jnp.float32)
    b = jnp.asarray(b, jnp.float32)

    if b.ndim == 0:
        return _scalar_b_path(a, b)
    return _tensor_b_path(a, b)


def _tensor_b_path(a, b):
    if b.shape != a.shape:
        # TODO(synk): express general PyTorch broadcasting via b's BlockSpec
        # index_map instead of materializing the broadcast in HBM (only costs
        # extra bytes when b is genuinely smaller than a, e.g. per-channel b).
        b = jnp.broadcast_to(b, a.shape)

    size = a.size
    L, tm, rows_pad = _slab_geometry(size)
    a2d = _pad_to_slab(a.reshape(-1), rows_pad, L)
    b2d = _pad_to_slab(b.reshape(-1), rows_pad, L)

    out2d = pl.pallas_call(
        _div_div_kernel,
        out_shape=jax.ShapeDtypeStruct((rows_pad, L), jnp.float32),
        grid=(rows_pad // tm,),
        in_specs=[
            pl.BlockSpec((tm, L), lambda i: (i, 0)),
            pl.BlockSpec((tm, L), lambda i: (i, 0)),
        ],
        out_specs=pl.BlockSpec((tm, L), lambda i: (i, 0)),
        compiler_params=pltpu.CompilerParams(
            dimension_semantics=("parallel",),
            vmem_limit_bytes=32 * 1024 * 1024,
        ),
        cost_estimate=pl.CostEstimate(
            flops=2 * size,
            transcendentals=0,
            bytes_accessed=3 * size * 4,
        ),
    )(a2d, b2d)
    return out2d.reshape(-1)[:size].reshape(a.shape)


def _scalar_b_path(a, b):
    size = a.size
    L, tm, rows_pad = _slab_geometry(size)
    a2d = _pad_to_slab(a.reshape(-1), rows_pad, L)
    b1 = b.reshape(1)

    out2d = pl.pallas_call(
        _sq_div_scalar_kernel,
        out_shape=jax.ShapeDtypeStruct((rows_pad, L), jnp.float32),
        grid=(rows_pad // tm,),
        in_specs=[
            pl.BlockSpec(memory_space=pltpu.SMEM),        # scalar b in SMEM
            pl.BlockSpec((tm, L), lambda i: (i, 0)),      # tiled a
        ],
        out_specs=pl.BlockSpec((tm, L), lambda i: (i, 0)),
        compiler_params=pltpu.CompilerParams(
            dimension_semantics=("parallel",),
            vmem_limit_bytes=32 * 1024 * 1024,
        ),
        cost_estimate=pl.CostEstimate(
            flops=2 * size,
            transcendentals=0,
            bytes_accessed=2 * size * 4,
        ),
    )(b1, a2d)
    return out2d.reshape(-1)[:size].reshape(a.shape)


# ----------------------------- test ------------------------------------------

if __name__ == "__main__":
    key = jax.random.PRNGKey(0)
    ka, kb = jax.random.split(key)

    # Small NCHW shapes: batch=2, channels=4, spatial=16x16
    a = jax.random.normal(ka, (2, 4, 16, 16), dtype=jnp.float32) + 3.0
    b = jax.random.normal(kb, (2, 4, 16, 16), dtype=jnp.float32) + 3.0

    # tensor-b path (same shape)
    out = jax.block_until_ready(simple_div_module(a, b))
    c_ref = a / b
    ref = c_ref / c_ref
    assert jnp.allclose(out, ref, rtol=1e-6, atol=1e-6), "tensor-b path mismatch"

    # tensor-b path (broadcasting b, per-channel)
    b_ch = jax.random.normal(kb, (1, 4, 1, 1), dtype=jnp.float32) + 3.0
    out_bc = jax.block_until_ready(simple_div_module(a, b_ch))
    c_bc = a / b_ch
    ref_bc = c_bc / c_bc
    assert jnp.allclose(out_bc, ref_bc, rtol=1e-6, atol=1e-6), "broadcast-b path mismatch"

    # scalar-b path
    b_scalar = jnp.float32(2.5)
    out_s = jax.block_until_ready(simple_div_module(a, b_scalar))
    ref_s = (a * a) / b_scalar
    assert jnp.allclose(out_s, ref_s, rtol=1e-6, atol=1e-6), "scalar-b path mismatch"

    print("KERNEL_OK")
</pallas_src>

<mosaic_0001>
module attributes {stable_mosaic.version = 11 : i64} {
  func.func @_div_div_kernel(%arg0: i32, %arg1: memref<8x1024xf32, #tpu.memory_space<vmem>>, %arg2: memref<8x1024xf32, #tpu.memory_space<vmem>>, %arg3: memref<8x1024xf32, #tpu.memory_space<vmem>>) attributes {dimension_semantics = [#tpu.dimension_semantics<parallel>], iteration_bounds = array<i64: 1>, scalar_prefetch = 0 : i64, scratch_operands = 0 : i64, tpu.core_type = #tpu.core_type<tc>, window_params = [{transform_indices = @transform_0, window_bounds = array<i64: 8, 1024>}, {transform_indices = @transform_1, window_bounds = array<i64: 8, 1024>}, {transform_indices = @transform_2, window_bounds = array<i64: 8, 1024>}]} {
    %c0 = arith.constant 0 : index
    %c0_0 = arith.constant 0 : index
    %0 = vector.load %arg1[%c0, %c0_0] : memref<8x1024xf32, #tpu.memory_space<vmem>>, vector<8x1024xf32>
    %c0_1 = arith.constant 0 : index
    %c0_2 = arith.constant 0 : index
    %1 = vector.load %arg2[%c0_1, %c0_2] : memref<8x1024xf32, #tpu.memory_space<vmem>>, vector<8x1024xf32>
    %2 = arith.divf %0, %1 : vector<8x1024xf32>
    %3 = arith.divf %2, %2 : vector<8x1024xf32>
    %c0_3 = arith.constant 0 : index
    %c0_4 = arith.constant 0 : index
    %4 = vector.load %arg3[%c0_3, %c0_4] : memref<8x1024xf32, #tpu.memory_space<vmem>>, vector<8x1024xf32>
    tpu.vector_store %arg3[%c0_3, %c0_4], %3 {strides = array<i32>} : memref<8x1024xf32, #tpu.memory_space<vmem>>, vector<8x1024xf32>,
    return
  }
  func.func @transform_0(%arg0: i32) -> (i32, i32) {
    %c0_i32 = arith.constant 0 : i32
    %c0_i32_0 = arith.constant 0 : i32
    return %arg0, %c0_i32 : i32, i32
  }
  func.func @transform_1(%arg0: i32) -> (i32, i32) {
    %c0_i32 = arith.constant 0 : i32
    %c0_i32_0 = arith.constant 0 : i32
    return %arg0, %c0_i32 : i32, i32
  }
  func.func @transform_2(%arg0: i32) -> (i32, i32) {
    %c0_i32 = arith.constant 0 : i32
    %c0_i32_0 = arith.constant 0 : i32
    return %arg0, %c0_i32 : i32, i32
  }
}

</mosaic_0001>

<llo_original>
// kernel: tpu_custom_call.1
$region0: #{tpu_custom_call.1}
  #allocation0 [shape = 'u32[]', space=smem, size = 0x4, offset = 0x4, fixed_abs, tag = 'smem constant byte address 0x4 - core index']
  #allocation1 [shape = 'u32[72,128]{1,0:T(1,128)}', space=vmem, size = 0x9000, scoped, tag = 'internal scratch']
  %s0 = inlined_call_operand.hbm [shape: f32[8,1024], index: 0, kind: input, shape index: {}]
  %s1 = inlined_call_operand.hbm [shape: f32[8,1024], index: 1, kind: input, shape index: {}]
  %s2 = inlined_call_operand.hbm [shape: f32[8,1024], index: 2, kind: output, shape index: {}]
  %s3 = sld [smem:[#allocation0]]
  $region26: #{tpu_custom_call.1} parent=0
    _
  %s5 = ssub.s32 1, %s3
  %s6 = scalar_select 0, %s5, %s3
  $region1: #{tpu_custom_call.1} parent=0
    #allocation2 [shape = 'u8[32768]{0}', space=vmem, size = 0x8000, scoped, tag = 'input window, operand 0, single buffered']
    #allocation3 [shape = 's32[1]{0}', space=sflag, size = 0x4, scoped, tag = 'scoped memory for tpu_custom_call.1']
    #allocation4 [shape = 's32[1]{0}', space=sflag, size = 0x4, scoped, tag = 'scoped memory for tpu_custom_call.1']
    #allocation5 [shape = 'u8[32768]{0}', space=vmem, size = 0x8000, scoped, tag = 'input window, operand 1, single buffered']
    #allocation6 [shape = 's32[1]{0}', space=sflag, size = 0x4, scoped, tag = 'scoped memory for tpu_custom_call.1']
    #allocation7 [shape = 'u8[32768]{0}', space=vmem, size = 0x8000, scoped, tag = 'output window, operand 0, single buffered']
    %7 = vsyncpa [#allocation3], 0
    %8 = vsyncpa [#allocation6], 0
    %9 = vsyncpa [#allocation4], 0
    // Predicated region
    $region2: #{tpu_custom_call.1} parent=1 // pred_check
      _
    $region3: #{tpu_custom_call.1} parent=1 // pred_check_branch
      %11 = sbr.rel (0) target = $region5
    $region4: #{tpu_custom_call.1} parent=1 // pred_region
      %13 = vsyncadd [#allocation3], 0
      %s15 = sshll.u32 %s0, 4
      %s16 = int_to_ptr.hbm [resolvable:$true] %s15
      %s17 = sshll.u32 [#allocation2], 4
      %s18 = int_to_ptr.vmem [resolvable:$true] %s17
      %20 = dma.hbm_to_vmem [thread:$0]  %s16, 1024, %s18, [#allocation3]
    $region5: #{tpu_custom_call.1} parent=1 // pred_fallthru
      _
    // Predicated region
    $region6: #{tpu_custom_call.1} parent=1 // pred_check
      _
    $region7: #{tpu_custom_call.1} parent=1 // pred_check_branch
      %22 = sbr.rel (0) target = $region9
    $region8: #{tpu_custom_call.1} parent=1 // pred_region
      %24 = vsyncadd [#allocation6], 0
      %s26 = sshll.u32 %s1, 4
      %s27 = int_to_ptr.hbm [resolvable:$true] %s26
      %s28 = sshll.u32 [#allocation5], 4
      %s29 = int_to_ptr.vmem [resolvable:$true] %s28
      %31 = dma.hbm_to_vmem [thread:$0]  %s27, 1024, %s29, [#allocation6]
    $region9: #{tpu_custom_call.1} parent=1 // pred_fallthru
      _
    // Predicated region
    $region10: #{tpu_custom_call.1} parent=1 // pred_check
      _
    $region11: #{tpu_custom_call.1} parent=1 // pred_check_branch
      %33 = sbr.rel (0) target = $region13
    $region12: #{tpu_custom_call.1} parent=1 // pred_region
      %35 = dma.done [#allocation3], 1024
    $region13: #{tpu_custom_call.1} parent=1 // pred_fallthru
      _
    // Predicated region
    $region14: #{tpu_custom_call.1} parent=1 // pred_check
      _
    $region15: #{tpu_custom_call.1} parent=1 // pred_check_branch
      %37 = sbr.rel (0) target = $region17
    $region16: #{tpu_custom_call.1} parent=1 // pred_region
      %39 = dma.done [#allocation6], 1024
    $region17: #{tpu_custom_call.1} parent=1 // pred_fallthru
      _
    %v40 = vld [vmem:[#allocation2] sm:$0xff]
    %v41 = vld [vmem:[#allocation2 + $0x8] sm:$0xff]
    %v42 = vld [vmem:[#allocation2 + $0x10] sm:$0xff]
    %v43 = vld [vmem:[#allocation2 + $0x18] sm:$0xff]
    %v44 = vld [vmem:[#allocation2 + $0x20] sm:$0xff]
    %v45 = vld [vmem:[#allocation2 + $0x28] sm:$0xff]
    %v46 = vld [vmem:[#allocation2 + $0x30] sm:$0xff]
    %v47 = vld [vmem:[#allocation2 + $0x38] sm:$0xff]
    %v48 = vld [vmem:[#allocation5] sm:$0xff]
    %v49 = vld [vmem:[#allocation5 + $0x8] sm:$0xff]
    %v50 = vld [vmem:[#allocation5 + $0x10] sm:$0xff]
    %v51 = vld [vmem:[#allocation5 + $0x18] sm:$0xff]
    %v52 = vld [vmem:[#allocation5 + $0x20] sm:$0xff]
    %v53 = vld [vmem:[#allocation5 + $0x28] sm:$0xff]
    %v54 = vld [vmem:[#allocation5 + $0x30] sm:$0xff]
    %v55 = vld [vmem:[#allocation5 + $0x38] sm:$0xff]
    %v56 = vrcp.pop %v48
    %v57 = vmul.f32 %v48, %v56
    %v58 = vsub.f32 1.0, %v57
    %v59 = vmul.f32 %v56, %v58
    %v60 = vadd.f32 %v56, %v59
    %vm61 = vweird.f32 %v48
    %vm62 = vweird.f32 %v56
    %vm63 = vmor %vm61, %vm62
    %v64 = vsel %vm63, %v56, %v60
    %v65 = vand.u32 2147483647, %v48
    %vm66 = vcmp.eq.f32.partialorder %v65, 8.507059e+37
    %v67 = vand.u32 %v48, 2147483648
    %v68 = vor.u32 1.1754944e-38, %v67
    %v69 = vsel %vm66, %v68, %v64
    %v70 = vmul.f32 %v40, %v69
    %v71 = vrcp.pop %v49
    %v72 = vmul.f32 %v49, %v71
    %v73 = vsub.f32 1.0, %v72
    %v74 = vmul.f32 %v71, %v73
    %v75 = vadd.f32 %v71, %v74
    %vm76 = vweird.f32 %v49
    %vm77 = vweird.f32 %v71
    %vm78 = vmor %vm76, %vm77
    %v79 = vsel %vm78, %v71, %v75
    %v80 = vand.u32 2147483647, %v49
    %vm81 = vcmp.eq.f32.partialorder %v80, 8.507059e+37
    %v82 = vand.u32 %v49, 2147483648
    %v83 = vor.u32 1.1754944e-38, %v82
    %v84 = vsel %vm81, %v83, %v79
    %v85 = vmul.f32 %v41, %v84
    %v86 = vrcp.pop %v50
    %v87 = vmul.f32 %v50, %v86
    %v88 = vsub.f32 1.0, %v87
    %v89 = vmul.f32 %v86, %v88
    %v90 = vadd.f32 %v86, %v89
    %vm91 = vweird.f32 %v50
    %vm92 = vweird.f32 %v86
    %vm93 = vmor %vm91, %vm92
    %v94 = vsel %vm93, %v86, %v90
    %v95 = vand.u32 2147483647, %v50
    %vm96 = vcmp.eq.f32.partialorder %v95, 8.507059e+37
    %v97 = vand.u32 %v50, 2147483648
    %v98 = vor.u32 1.1754944e-38, %v97
    %v99 = vsel %vm96, %v98, %v94
    %v100 = vmul.f32 %v42, %v99
    %v101 = vrcp.pop %v51
    %v102 = vmul.f32 %v51, %v101
    %v103 = vsub.f32 1.0, %v102
    %v104 = vmul.f32 %v101, %v103
    %v105 = vadd.f32 %v101, %v104
    %vm106 = vweird.f32 %v51
    %vm107 = vweird.f32 %v101
    %vm108 = vmor %vm106, %vm107
    %v109 = vsel %vm108, %v101, %v105
    %v110 = vand.u32 2147483647, %v51
    %vm111 = vcmp.eq.f32.partialorder %v110, 8.507059e+37
    %v112 = vand.u32 %v51, 2147483648
    %v113 = vor.u32 1.1754944e-38, %v112
    %v114 = vsel %vm111, %v113, %v109
    %v115 = vmul.f32 %v43, %v114
    %v116 = vrcp.pop %v52
    %v117 = vmul.f32 %v52, %v116
    %v118 = vsub.f32 1.0, %v117
    %v119 = vmul.f32 %v116, %v118
    %v120 = vadd.f32 %v116, %v119
    %vm121 = vweird.f32 %v52
    %vm122 = vweird.f32 %v116
    %vm123 = vmor %vm121, %vm122
    %v124 = vsel %vm123, %v116, %v120
    %v125 = vand.u32 2147483647, %v52
    %vm126 = vcmp.eq.f32.partialorder %v125, 8.507059e+37
    %v127 = vand.u32 %v52, 2147483648
    %v128 = vor.u32 1.1754944e-38, %v127
    %v129 = vsel %vm126, %v128, %v124
    %v130 = vmul.f32 %v44, %v129
    %v131 = vrcp.pop %v53
    %v132 = vmul.f32 %v53, %v131
    %v133 = vsub.f32 1.0, %v132
    %v134 = vmul.f32 %v131, %v133
    %v135 = vadd.f32 %v131, %v134
    %vm136 = vweird.f32 %v53
    %vm137 = vweird.f32 %v131
    %vm138 = vmor %vm136, %vm137
    %v139 = vsel %vm138, %v131, %v135
    %v140 = vand.u32 2147483647, %v53
    %vm141 = vcmp.eq.f32.partialorder %v140, 8.507059e+37
    %v142 = vand.u32 %v53, 2147483648
    %v143 = vor.u32 1.1754944e-38, %v142
    %v144 = vsel %vm141, %v143, %v139
    %v145 = vmul.f32 %v45, %v144
    %v146 = vrcp.pop %v54
    %v147 = vmul.f32 %v54, %v146
    %v148 = vsub.f32 1.0, %v147
    %v149 = vmul.f32 %v146, %v148
    %v150 = vadd.f32 %v146, %v149
    %vm151 = vweird.f32 %v54
    %vm152 = vweird.f32 %v146
    %vm153 = vmor %vm151, %vm152
    %v154 = vsel %vm153, %v146, %v150
    %v155 = vand.u32 2147483647, %v54
    %vm156 = vcmp.eq.f32.partialorder %v155, 8.507059e+37
    %v157 = vand.u32 %v54, 2147483648
    %v158 = vor.u32 1.1754944e-38, %v157
    %v159 = vsel %vm156, %v158, %v154
    %v160 = vmul.f32 %v46, %v159
    %v161 = vrcp.pop %v55
    %v162 = vmul.f32 %v55, %v161
    %v163 = vsub.f32 1.0, %v162
    %v164 = vmul.f32 %v161, %v163
    %v165 = vadd.f32 %v161, %v164
    %vm166 = vweird.f32 %v55
    %vm167 = vweird.f32 %v161
    %vm168 = vmor %vm166, %vm167
    %v169 = vsel %vm168, %v161, %v165
    %v170 = vand.u32 2147483647, %v55
    %vm171 = vcmp.eq.f32.partialorder %v170, 8.507059e+37
    %v172 = vand.u32 %v55, 2147483648
    %v173 = vor.u32 1.1754944e-38, %v172
    %v174 = vsel %vm171, %v173, %v169
    %v175 = vmul.f32 %v47, %v174
    %v176 = vrcp.pop %v70
    %v177 = vmul.f32 %v70, %v176
    %v178 = vsub.f32 1.0, %v177
    %v179 = vmul.f32 %v176, %v178
    %v180 = vadd.f32 %v176, %v179
    %vm181 = vweird.f32 %v70
    %vm182 = vweird.f32 %v176
    %vm183 = vmor %vm181, %vm182
    %v184 = vsel %vm183, %v176, %v180
    %v185 = vand.u32 2147483647, %v70
    %vm186 = vcmp.eq.f32.partialorder %v185, 8.507059e+37
    %v187 = vand.u32 %v70, 2147483648
    %v188 = vor.u32 1.1754944e-38, %v187
    %v189 = vsel %vm186, %v188, %v184
    %v190 = vmul.f32 %v70, %v189
    %v191 = vrcp.pop %v85
    %v192 = vmul.f32 %v85, %v191
    %v193 = vsub.f32 1.0, %v192
    %v194 = vmul.f32 %v191, %v193
    %v195 = vadd.f32 %v191, %v194
    %vm196 = vweird.f32 %v85
    %vm197 = vweird.f32 %v191
    %vm198 = vmor %vm196, %vm197
    %v199 = vsel %vm198, %v191, %v195
    %v200 = vand.u32 2147483647, %v85
    %vm201 = vcmp.eq.f32.partialorder %v200, 8.507059e+37
    %v202 = vand.u32 %v85, 2147483648
    %v203 = vor.u32 1.1754944e-38, %v202
    %v204 = vsel %vm201, %v203, %v199
    %v205 = vmul.f32 %v85, %v204
    %v206 = vrcp.pop %v100
    %v207 = vmul.f32 %v100, %v206
    %v208 = vsub.f32 1.0, %v207
    %v209 = vmul.f32 %v206, %v208
    %v210 = vadd.f32 %v206, %v209
    %vm211 = vweird.f32 %v100
    %vm212 = vweird.f32 %v206
    %vm213 = vmor %vm211, %vm212
    %v214 = vsel %vm213, %v206, %v210
    %v215 = vand.u32 2147483647, %v100
    %vm216 = vcmp.eq.f32.partialorder %v215, 8.507059e+37
    %v217 = vand.u32 %v100, 2147483648
    %v218 = vor.u32 1.1754944e-38, %v217
    %v219 = vsel %vm216, %v218, %v214
    %v220 = vmul.f32 %v100, %v219
    %v221 = vrcp.pop %v115
    %v222 = vmul.f32 %v115, %v221
    %v223 = vsub.f32 1.0, %v222
    %v224 = vmul.f32 %v221, %v223
    %v225 = vadd.f32 %v221, %v224
    %vm226 = vweird.f32 %v115
    %vm227 = vweird.f32 %v221
    %vm228 = vmor %vm226, %vm227
    %v229 = vsel %vm228, %v221, %v225
    %v230 = vand.u32 2147483647, %v115
    %vm231 = vcmp.eq.f32.partialorder %v230, 8.507059e+37
    %v232 = vand.u32 %v115, 2147483648
    %v233 = vor.u32 1.1754944e-38, %v232
    %v234 = vsel %vm231, %v233, %v229
    %v235 = vmul.f32 %v115, %v234
    %v236 = vrcp.pop %v130
    %v237 = vmul.f32 %v130, %v236
    %v238 = vsub.f32 1.0, %v237
    %v239 = vmul.f32 %v236, %v238
    %v240 = vadd.f32 %v236, %v239
    %vm241 = vweird.f32 %v130
    %vm242 = vweird.f32 %v236
    %vm243 = vmor %vm241, %vm242
    %v244 = vsel %vm243, %v236, %v240
    %v245 = vand.u32 2147483647, %v130
    %vm246 = vcmp.eq.f32.partialorder %v245, 8.507059e+37
    %v247 = vand.u32 %v130, 2147483648
    %v248 = vor.u32 1.1754944e-38, %v247
    %v249 = vsel %vm246, %v248, %v244
    %v250 = vmul.f32 %v130, %v249
    %v251 = vrcp.pop %v145
    %v252 = vmul.f32 %v145, %v251
    %v253 = vsub.f32 1.0, %v252
    %v254 = vmul.f32 %v251, %v253
    %v255 = vadd.f32 %v251, %v254
    %vm256 = vweird.f32 %v145
    %vm257 = vweird.f32 %v251
    %vm258 = vmor %vm256, %vm257
    %v259 = vsel %vm258, %v251, %v255
    %v260 = vand.u32 2147483647, %v145
    %vm261 = vcmp.eq.f32.partialorder %v260, 8.507059e+37
    %v262 = vand.u32 %v145, 2147483648
    %v263 = vor.u32 1.1754944e-38, %v262
    %v264 = vsel %vm261, %v263, %v259
    %v265 = vmul.f32 %v145, %v264
    %v266 = vrcp.pop %v160
    %v267 = vmul.f32 %v160, %v266
    %v268 = vsub.f32 1.0, %v267
    %v269 = vmul.f32 %v266, %v268
    %v270 = vadd.f32 %v266, %v269
    %vm271 = vweird.f32 %v160
    %vm272 = vweird.f32 %v266
    %vm273 = vmor %vm271, %vm272
    %v274 = vsel %vm273, %v266, %v270
    %v275 = vand.u32 2147483647, %v160
    %vm276 = vcmp.eq.f32.partialorder %v275, 8.507059e+37
    %v277 = vand.u32 %v160, 2147483648
    %v278 = vor.u32 1.1754944e-38, %v277
    %v279 = vsel %vm276, %v278, %v274
    %v280 = vmul.f32 %v160, %v279
    %v281 = vrcp.pop %v175
    %v282 = vmul.f32 %v175, %v281
    %v283 = vsub.f32 1.0, %v282
    %v284 = vmul.f32 %v281, %v283
    %v285 = vadd.f32 %v281, %v284
    %vm286 = vweird.f32 %v175
    %vm287 = vweird.f32 %v281
    %vm288 = vmor %vm286, %vm287
    %v289 = vsel %vm288, %v281, %v285
    %v290 = vand.u32 2147483647, %v175
    %vm291 = vcmp.eq.f32.partialorder %v290, 8.507059e+37
    %v292 = vand.u32 %v175, 2147483648
    %v293 = vor.u32 1.1754944e-38, %v292
    %v294 = vsel %vm291, %v293, %v289
    %v295 = vmul.f32 %v175, %v294
    %296 = vst [vmem:[#allocation7] sm:$0xff] %v190
    %297 = vst [vmem:[#allocation7 + $0x8] sm:$0xff] %v205
    %298 = vst [vmem:[#allocation7 + $0x10] sm:$0xff] %v220
    %299 = vst [vmem:[#allocation7 + $0x18] sm:$0xff] %v235
    %300 = vst [vmem:[#allocation7 + $0x20] sm:$0xff] %v250
    %301 = vst [vmem:[#allocation7 + $0x28] sm:$0xff] %v265
    %302 = vst [vmem:[#allocation7 + $0x30] sm:$0xff] %v280
    %303 = vst [vmem:[#allocation7 + $0x38] sm:$0xff] %v295
    // Predicated region
    $region18: #{tpu_custom_call.1} parent=1 // pred_check
      _
    $region19: #{tpu_custom_call.1} parent=1 // pred_check_branch
      %305 = sbr.rel (0) target = $region21
    $region20: #{tpu_custom_call.1} parent=1 // pred_region
      %307 = vsyncadd [#allocation4], 0
      %s309 = sshll.u32 [#allocation7], 4
      %s310 = int_to_ptr.vmem [resolvable:$true] %s309
      %s311 = sshll.u32 %s2, 4
      %s312 = int_to_ptr.hbm [resolvable:$true] %s311
      %314 = dma.vmem_to_hbm [thread:$0]  %s310, 1024, %s312, [#allocation4]
    $region21: #{tpu_custom_call.1} parent=1 // pred_fallthru
      _
    // Predicated region
    $region22: #{tpu_custom_call.1} parent=1 // pred_check
      _
    $region23: #{tpu_custom_call.1} parent=1 // pred_check_branch
      %316 = sbr.rel (0) target = $region25
    $region24: #{tpu_custom_call.1} parent=1 // pred_region
      %318 = dma.done [#allocation4], 1024
    $region25: #{tpu_custom_call.1} parent=1 // pred_fallthru
      _
    %319 = vsyncpa [#allocation3], 1
    %320 = vsyncpa [#allocation6], 1
    %321 = vsyncpa [#allocation4], 1

</llo_original>
